<compile_context>
chip_gen: v5e
topology: v5e:2x2
jax: 0.10.0
libtpu: 0.0.40
codegen_flags: <defaults>
</compile_context>

<pallas_src>
import jax
import jax.numpy as jnp
from jax.experimental import pallas as pl
from jax.experimental.pallas import tpu as pltpu


def _round_up(n, m):
    return ((n + m - 1) // m) * m


def _pad_dim(n):
    """Lane-align a feature dim; prefer 256-multiples past the first 128 lanes
    so the last pass of the 256-wide v6e/v7x MXU is full."""
    p = _round_up(n, 128)
    if p > 128 and p % 256 != 0:
        p = _round_up(n, 256)
    return p


def _compute_vmem_limit(weight_bytes, stream_tile_bytes):
    """Single-buffered resident weights + double-buffered streaming tiles + headroom,
    clamped to the device's VMEM capacity."""
    need = weight_bytes + 2 * stream_tile_bytes
    budget = int(need * 1.25) + (8 << 20)          # compiler scratch / misc headroom
    try:
        cap = pltpu.get_tpu_info().vmem_capacity_bytes
    except Exception:
        cap = 64 << 20                              # conservative: v7x per-TC VMEM
    return max(16 << 20, min(budget, int(cap * 0.9)))


# ---------------------------------------------------------------------------
# Kernel
# ---------------------------------------------------------------------------
def film_kernel(x_ref, y_ref,
                wxf_ref, bxf_ref,      # fused x-side weight [Wg | Wb | Wx] + fused bias
                wout_ref, bout_ref,    # fc_out
                wy_ref, by_ref,        # y_out
                outx_ref, outy_ref, out_ref):
    Dp = wxf_ref.shape[0]              # padded input_dim  (multiple of 128)

    x = x_ref[...]                     # bf16 (TB, Dp)
    y = y_ref[...]                     # bf16 (TB, Dp)

    # Single MXU launch for everything with x on the LHS: [gamma | beta | out_x].
    xt = jnp.dot(x, wxf_ref[...], preferred_element_type=jnp.float32) + bxf_ref[...]

    # Store out_x immediately: releases its third of xt early (shorter f32 live range).
    outx_ref[...] = xt[:, 2 * Dp:].astype(outx_ref.dtype)

    gamma = xt[:, :Dp]
    beta = xt[:, Dp:2 * Dp]
    # FiLM conditioning (film = x, to_be_film = y): f32 elementwise on the VPU.
    av = gamma * y.astype(jnp.float32) + beta

    out_y = jnp.dot(y, wy_ref[...], preferred_element_type=jnp.float32) + by_ref[...]
    outy_ref[...] = out_y.astype(outy_ref.dtype)

    output = jnp.dot(av.astype(jnp.bfloat16), wout_ref[...],
                     preferred_element_type=jnp.float32) + bout_ref[...]
    out_ref[...] = output.astype(out_ref.dtype)


# ---------------------------------------------------------------------------
# One-time parameter preparation (cast / pad / fuse) -- do this at load time.
# ---------------------------------------------------------------------------
def prepare_params(params):
    f32, bf16 = jnp.float32, jnp.bfloat16
    D = params["w_gamma"].shape[0]
    O = params["w_out"].shape[1]
    Dp = _pad_dim(D)
    Op = _pad_dim(O)

    def pad2(a, rows, cols, dtype):
        a = a.astype(dtype)
        return jnp.pad(a, ((0, rows - a.shape[0]), (0, cols - a.shape[1])))

    # Fused x-side weight [Wg | Wb | Wx] -> (Dp, 2*Dp + Op) bf16, fused f32 bias.
    w_xf = jnp.concatenate([
        pad2(params["w_gamma"], Dp, Dp, bf16),
        pad2(params["w_beta"], Dp, Dp, bf16),
        pad2(params["w_x"], Dp, Op, bf16),
    ], axis=1)
    b_xf = jnp.concatenate([
        pad2(params["b_gamma"], 1, Dp, f32),
        pad2(params["b_beta"], 1, Dp, f32),
        pad2(params["b_x"], 1, Op, f32),
    ], axis=1)

    return {
        "w_xf": w_xf, "b_xf": b_xf,
        "w_out": pad2(params["w_out"], Dp, Op, bf16),
        "b_out": pad2(params["b_out"], 1, Op, f32),
        "w_y": pad2(params["w_y"], Dp, Op, bf16),
        "b_y": pad2(params["b_y"], 1, Op, f32),
        "D": D, "O": O, "Dp": Dp, "Op": Op,
    }


# ---------------------------------------------------------------------------
# Forward wrapper
# ---------------------------------------------------------------------------
def film_forward(x, y, prepared, *, block_b=256):
    """Pallas FiLM forward. `prepared` comes from prepare_params().
    Returns (out_x, out_y, output) like the torch module."""
    B, D = x.shape
    Dp, Op, O = prepared["Dp"], prepared["Op"], prepared["O"]
    assert D == prepared["D"], "input_dim mismatch with prepared params"

    bf16 = jnp.bfloat16

    # Batch tile: bf16 sublane packing -> multiple of 16.  Prefer 256 (full MXU M
    # on v6e/v7x), but keep >= 2 tiles when possible so the "parallel" grid axis
    # can feed both v7x TensorCores.
    B16 = _round_up(B, 16)
    TB = min(B16, _round_up(block_b, 16))
    if B16 // TB < 2 and TB > 16:
        TB = max(16, _round_up(B16 // 2, 16))
    Bp = _round_up(B, TB)

    def prep_act(a):
        # Skip pad/cast entirely when already aligned bf16 (saves an HBM round trip).
        if a.shape == (Bp, Dp) and a.dtype == bf16:
            return a
        a = a.astype(bf16)
        if a.shape != (Bp, Dp):
            a = jnp.pad(a, ((0, Bp - a.shape[0]), (0, Dp - a.shape[1])))
        return a

    xp = prep_act(x)
    yp = prep_act(y)

    w_xf, b_xf = prepared["w_xf"], prepared["b_xf"]
    w_out, b_out = prepared["w_out"], prepared["b_out"]
    w_y, b_y = prepared["w_y"], prepared["b_y"]

    act_spec_x = pl.BlockSpec((TB, Dp), lambda i: (i, 0))
    act_spec_y = pl.BlockSpec((TB, Dp), lambda i: (i, 0))
    out_spec = pl.BlockSpec((TB, Op), lambda i: (i, 0))

    def resident(a):
        # Constant index_map -> fetched once, stays resident in VMEM.
        # Single-buffered: no need for a second copy of weights that never change.
        return pl.BlockSpec(a.shape, lambda i: (0, 0),
                            pipeline_mode=pl.Buffered(buffer_count=1))

    # VMEM budget: weights once + double-buffered x/y tiles + double-buffered
    # three f32 output tiles.
    weight_bytes = sum(int(a.size) * a.dtype.itemsize
                       for a in (w_xf, b_xf, w_out, b_out, w_y, b_y))
    stream_tile_bytes = 2 * (TB * Dp * 2) + 3 * (TB * Op * 4)
    vmem_limit = _compute_vmem_limit(weight_bytes, stream_tile_bytes)

    out_shapes = (
        jax.ShapeDtypeStruct((Bp, Op), jnp.float32),   # out_x
        jax.ShapeDtypeStruct((Bp, Op), jnp.float32),   # out_y
        jax.ShapeDtypeStruct((Bp, Op), jnp.float32),   # output
    )

    out_x, out_y, output = pl.pallas_call(
        film_kernel,
        out_shape=out_shapes,
        grid_spec=pltpu.PrefetchScalarGridSpec(
            num_scalar_prefetch=0,
            grid=(Bp // TB,),
            in_specs=[
                act_spec_x,                 # x
                act_spec_y,                 # y
                resident(w_xf), resident(b_xf),
                resident(w_out), resident(b_out),
                resident(w_y), resident(b_y),
            ],
            out_specs=(out_spec, out_spec, out_spec),
        ),
        compiler_params=pltpu.CompilerParams(
            dimension_semantics=("parallel",),   # megacore sharding on v7x
            vmem_limit_bytes=vmem_limit,
        ),
    )(xp, yp, w_xf, b_xf, w_out, b_out, w_y, b_y)

    # Only slice when padding was actually applied.
    if B != Bp or O != Op:
        out_x = out_x[:B, :O]
        out_y = out_y[:B, :O]
        output = output[:B, :O]
    return out_x, out_y, output


# ---------------------------------------------------------------------------
# Synthetic params + pure-JAX reference
# ---------------------------------------------------------------------------
def init_params(key, input_dim, output_dim):
    """Deterministic synthetic params, torch-Linear-like scaling, stored (in, out)."""
    ks = jax.random.split(key, 10)
    s_in = 1.0 / jnp.sqrt(jnp.float32(input_dim))

    # fc: Linear(input_dim, 2*input_dim) split into gamma / beta halves.
    w_fc = jax.random.uniform(ks[0], (input_dim, 2 * input_dim), jnp.float32, -s_in, s_in)
    b_fc = jax.random.uniform(ks[1], (1, 2 * input_dim), jnp.float32, -s_in, s_in)

    return {
        "w_gamma": w_fc[:, :input_dim],
        "b_gamma": b_fc[:, :input_dim],
        "w_beta": w_fc[:, input_dim:],
        "b_beta": b_fc[:, input_dim:],
        "w_out": jax.random.uniform(ks[2], (input_dim, output_dim), jnp.float32, -s_in, s_in),
        "b_out": jax.random.uniform(ks[3], (1, output_dim), jnp.float32, -s_in, s_in),
        "w_x": jax.random.uniform(ks[4], (input_dim, output_dim), jnp.float32, -s_in, s_in),
        "b_x": jax.random.uniform(ks[5], (1, output_dim), jnp.float32, -s_in, s_in),
        "w_y": jax.random.uniform(ks[6], (input_dim, output_dim), jnp.float32, -s_in, s_in),
        "b_y": jax.random.uniform(ks[7], (1, output_dim), jnp.float32, -s_in, s_in),
    }


def film_reference(x, y, params, compute_dtype=jnp.float32):
    """Pure-JAX reference of the torch forward (audio_video, x_film=True).
    With compute_dtype=bfloat16 it mirrors the kernel's MXU precision
    (bf16 operands, f32 accumulation)."""
    cd = compute_dtype
    xc = x.astype(cd).astype(jnp.float32)
    yc = y.astype(cd).astype(jnp.float32)

    def mm(a, w):
        return jnp.dot(a.astype(cd), w.astype(cd), preferred_element_type=jnp.float32)

    gamma = mm(xc, params["w_gamma"]) + params["b_gamma"]
    beta = mm(xc, params["w_beta"]) + params["b_beta"]
    av = gamma * yc + beta
    output = mm(av, params["w_out"]) + params["b_out"]
    out_x = mm(xc, params["w_x"]) + params["b_x"]
    out_y = mm(yc, params["w_y"]) + params["b_y"]
    return out_x, out_y, output


if __name__ == "__main__":
    B, D, O = 2, 32, 16  # batch, input_dim, output_dim (small synthetic shapes)

    key = jax.random.PRNGKey(0)
    kx, ky, kp = jax.random.split(key, 3)
    x = jax.random.normal(kx, (B, D), jnp.float32)
    y = jax.random.normal(ky, (B, D), jnp.float32)
    params = init_params(kp, D, O)

    prepared = prepare_params(params)          # one-time weight cast/pad/fuse
    out_x, out_y, output = film_forward(x, y, prepared)
    jax.block_until_ready((out_x, out_y, output))

    # Tight check against a reference that mirrors the kernel's bf16-operand /
    # f32-accumulate MXU precision.
    rx, ry, ro = film_reference(x, y, params, compute_dtype=jnp.bfloat16)
    assert jnp.allclose(out_x, rx, atol=2e-3, rtol=2e-3)
    assert jnp.allclose(out_y, ry, atol=2e-3, rtol=2e-3)
    assert jnp.allclose(output, ro, atol=2e-3, rtol=2e-3)

    # Loose sanity check against the exact-f32 torch math (bf16 quantization noise only).
    fx, fy, fo = film_reference(x, y, params, compute_dtype=jnp.float32)
    assert jnp.allclose(out_x, fx, atol=1e-1, rtol=1e-1)
    assert jnp.allclose(out_y, fy, atol=1e-1, rtol=1e-1)
    assert jnp.allclose(output, fo, atol=1e-1, rtol=1e-1)

    print("KERNEL_OK")
</pallas_src>

<mosaic_0001>
module attributes {stable_mosaic.version = 11 : i64} {
  func.func @film_kernel(%arg0: i32, %arg1: memref<16x128xbf16, #tpu.memory_space<vmem>>, %arg2: memref<16x128xbf16, #tpu.memory_space<vmem>>, %arg3: memref<128x384xbf16, #tpu.memory_space<vmem>>, %arg4: memref<1x384xf32, #tpu.memory_space<vmem>>, %arg5: memref<128x128xbf16, #tpu.memory_space<vmem>>, %arg6: memref<1x128xf32, #tpu.memory_space<vmem>>, %arg7: memref<128x128xbf16, #tpu.memory_space<vmem>>, %arg8: memref<1x128xf32, #tpu.memory_space<vmem>>, %arg9: memref<16x128xf32, #tpu.memory_space<vmem>>, %arg10: memref<16x128xf32, #tpu.memory_space<vmem>>, %arg11: memref<16x128xf32, #tpu.memory_space<vmem>>) attributes {dimension_semantics = [#tpu.dimension_semantics<parallel>], iteration_bounds = array<i64: 1>, scalar_prefetch = 0 : i64, scratch_operands = 0 : i64, tpu.core_type = #tpu.core_type<tc>, window_params = [{transform_indices = @transform_0, window_bounds = array<i64: 16, 128>}, {transform_indices = @transform_1, window_bounds = array<i64: 16, 128>}, {pipeline_mode = #tpu.pipeline_mode<synchronous>, transform_indices = @transform_2, window_bounds = array<i64: 128, 384>}, {pipeline_mode = #tpu.pipeline_mode<synchronous>, transform_indices = @transform_3, window_bounds = array<i64: 1, 384>}, {pipeline_mode = #tpu.pipeline_mode<synchronous>, transform_indices = @transform_4, window_bounds = array<i64: 128, 128>}, {pipeline_mode = #tpu.pipeline_mode<synchronous>, transform_indices = @transform_5, window_bounds = array<i64: 1, 128>}, {pipeline_mode = #tpu.pipeline_mode<synchronous>, transform_indices = @transform_6, window_bounds = array<i64: 128, 128>}, {pipeline_mode = #tpu.pipeline_mode<synchronous>, transform_indices = @transform_7, window_bounds = array<i64: 1, 128>}, {transform_indices = @transform_8, window_bounds = array<i64: 16, 128>}, {transform_indices = @transform_9, window_bounds = array<i64: 16, 128>}, {transform_indices = @transform_10, window_bounds = array<i64: 16, 128>}]} {
    %c0 = arith.constant 0 : index
    %c0_0 = arith.constant 0 : index
    %0 = vector.load %arg1[%c0, %c0_0] : memref<16x128xbf16, #tpu.memory_space<vmem>>, vector<16x128xbf16>
    %c0_1 = arith.constant 0 : index
    %c0_2 = arith.constant 0 : index
    %1 = vector.load %arg2[%c0_1, %c0_2] : memref<16x128xbf16, #tpu.memory_space<vmem>>, vector<16x128xbf16>
    %c0_3 = arith.constant 0 : index
    %c0_4 = arith.constant 0 : index
    %2 = vector.load %arg3[%c0_3, %c0_4] : memref<128x384xbf16, #tpu.memory_space<vmem>>, vector<128x384xbf16>
    %cst = arith.constant dense<0.000000e+00> : vector<16x384xf32>
    %3 = tpu.matmul %0, %2, %cst {dimension_numbers = #tpu.dot_dimension_numbers<[1], [0], [0], [1], [0, 0, 1, 1], [], []>} : vector<16x128xbf16>, vector<128x384xbf16>, vector<16x384xf32> -> vector<16x384xf32>
    %c0_5 = arith.constant 0 : index
    %c0_6 = arith.constant 0 : index
    %4 = vector.load %arg4[%c0_5, %c0_6] : memref<1x384xf32, #tpu.memory_space<vmem>>, vector<1x384xf32>
    %5 = vector.broadcast %4 : vector<1x384xf32> to vector<16x384xf32>
    %6 = arith.addf %3, %5 : vector<16x384xf32>
    %7 = vector.extract_strided_slice %6 {offsets = [0, 256], sizes = [16, 128], strides = [1, 1]} : vector<16x384xf32> to vector<16x128xf32>
    %c0_7 = arith.constant 0 : index
    %c0_8 = arith.constant 0 : index
    %8 = vector.load %arg9[%c0_7, %c0_8] : memref<16x128xf32, #tpu.memory_space<vmem>>, vector<16x128xf32>
    tpu.vector_store %arg9[%c0_7, %c0_8], %7 {strides = array<i32>} : memref<16x128xf32, #tpu.memory_space<vmem>>, vector<16x128xf32>,
    %9 = vector.extract_strided_slice %6 {offsets = [0, 0], sizes = [16, 128], strides = [1, 1]} : vector<16x384xf32> to vector<16x128xf32>
    %10 = vector.extract_strided_slice %6 {offsets = [0, 128], sizes = [16, 128], strides = [1, 1]} : vector<16x384xf32> to vector<16x128xf32>
    %11 = arith.extf %1 : vector<16x128xbf16> to vector<16x128xf32>
    %12 = arith.mulf %9, %11 : vector<16x128xf32>
    %13 = arith.addf %12, %10 : vector<16x128xf32>
    %c0_9 = arith.constant 0 : index
    %c0_10 = arith.constant 0 : index
    %14 = vector.load %arg7[%c0_9, %c0_10] : memref<128x128xbf16, #tpu.memory_space<vmem>>, vector<128x128xbf16>
    %cst_11 = arith.constant dense<0.000000e+00> : vector<16x128xf32>
    %15 = tpu.matmul %1, %14, %cst_11 {dimension_numbers = #tpu.dot_dimension_numbers<[1], [0], [0], [1], [0, 0, 1, 1], [], []>} : vector<16x128xbf16>, vector<128x128xbf16>, vector<16x128xf32> -> vector<16x128xf32>
    %c0_12 = arith.constant 0 : index
    %c0_13 = arith.constant 0 : index
    %16 = vector.load %arg8[%c0_12, %c0_13] : memref<1x128xf32, #tpu.memory_space<vmem>>, vector<1x128xf32>
    %17 = vector.broadcast %16 : vector<1x128xf32> to vector<16x128xf32>
    %18 = arith.addf %15, %17 : vector<16x128xf32>
    %c0_14 = arith.constant 0 : index
    %c0_15 = arith.constant 0 : index
    %19 = vector.load %arg10[%c0_14, %c0_15] : memref<16x128xf32, #tpu.memory_space<vmem>>, vector<16x128xf32>
    tpu.vector_store %arg10[%c0_14, %c0_15], %18 {strides = array<i32>} : memref<16x128xf32, #tpu.memory_space<vmem>>, vector<16x128xf32>,
    %20 = arith.truncf %13 : vector<16x128xf32> to vector<16x128xbf16>
    %c0_16 = arith.constant 0 : index
    %c0_17 = arith.constant 0 : index
    %21 = vector.load %arg5[%c0_16, %c0_17] : memref<128x128xbf16, #tpu.memory_space<vmem>>, vector<128x128xbf16>
    %cst_18 = arith.constant dense<0.000000e+00> : vector<16x128xf32>
    %22 = tpu.matmul %20, %21, %cst_18 {dimension_numbers = #tpu.dot_dimension_numbers<[1], [0], [0], [1], [0, 0, 1, 1], [], []>} : vector<16x128xbf16>, vector<128x128xbf16>, vector<16x128xf32> -> vector<16x128xf32>
    %c0_19 = arith.constant 0 : index
    %c0_20 = arith.constant 0 : index
    %23 = vector.load %arg6[%c0_19, %c0_20] : memref<1x128xf32, #tpu.memory_space<vmem>>, vector<1x128xf32>
    %24 = vector.broadcast %23 : vector<1x128xf32> to vector<16x128xf32>
    %25 = arith.addf %22, %24 : vector<16x128xf32>
    %c0_21 = arith.constant 0 : index
    %c0_22 = arith.constant 0 : index
    %26 = vector.load %arg11[%c0_21, %c0_22] : memref<16x128xf32, #tpu.memory_space<vmem>>, vector<16x128xf32>
    tpu.vector_store %arg11[%c0_21, %c0_22], %25 {strides = array<i32>} : memref<16x128xf32, #tpu.memory_space<vmem>>, vector<16x128xf32>,
    return
  }
  func.func @transform_0(%arg0: i32) -> (i32, i32) {
    %c0_i32 = arith.constant 0 : i32
    %c0_i32_0 = arith.constant 0 : i32
    return %arg0, %c0_i32 : i32, i32
  }
  func.func @transform_1(%arg0: i32) -> (i32, i32) {
    %c0_i32 = arith.constant 0 : i32
    %c0_i32_0 = arith.constant 0 : i32
    return %arg0, %c0_i32 : i32, i32
  }
  func.func @transform_2(%arg0: i32) -> (i32, i32) {
    %c0_i32 = arith.constant 0 : i32
    %c0_i32_0 = arith.constant 0 : i32
    %c0_i32_1 = arith.constant 0 : i32
    return %c0_i32, %c0_i32_0 : i32, i32
  }
  func.func @transform_3(%arg0: i32) -> (i32, i32) {
    %c0_i32 = arith.constant 0 : i32
    %c0_i32_0 = arith.constant 0 : i32
    %c0_i32_1 = arith.constant 0 : i32
    return %c0_i32, %c0_i32_0 : i32, i32
  }
  func.func @transform_4(%arg0: i32) -> (i32, i32) {
    %c0_i32 = arith.constant 0 : i32
    %c0_i32_0 = arith.constant 0 : i32
    %c0_i32_1 = arith.constant 0 : i32
    return %c0_i32, %c0_i32_0 : i32, i32
  }
  func.func @transform_5(%arg0: i32) -> (i32, i32) {
    %c0_i32 = arith.constant 0 : i32
    %c0_i32_0 = arith.constant 0 : i32
    %c0_i32_1 = arith.constant 0 : i32
    return %c0_i32, %c0_i32_0 : i32, i32
  }
  func.func @transform_6(%arg0: i32) -> (i32, i32) {
    %c0_i32 = arith.constant 0 : i32
    %c0_i32_0 = arith.constant 0 : i32
    %c0_i32_1 = arith.constant 0 : i32
    return %c0_i32, %c0_i32_0 : i32, i32
  }
  func.func @transform_7(%arg0: i32) -> (i32, i32) {
    %c0_i32 = arith.constant 0 : i32
    %c0_i32_0 = arith.constant 0 : i32
    %c0_i32_1 = arith.constant 0 : i32
    return %c0_i32, %c0_i32_0 : i32, i32
  }
  func.func @transform_8(%arg0: i32) -> (i32, i32) {
    %c0_i32 = arith.constant 0 : i32
    %c0_i32_0 = arith.constant 0 : i32
    return %arg0, %c0_i32 : i32, i32
  }
  func.func @transform_9(%arg0: i32) -> (i32, i32) {
    %c0_i32 = arith.constant 0 : i32
    %c0_i32_0 = arith.constant 0 : i32
    return %arg0, %c0_i32 : i32, i32
  }
  func.func @transform_10(%arg0: i32) -> (i32, i32) {
    %c0_i32 = arith.constant 0 : i32
    %c0_i32_0 = arith.constant 0 : i32
    return %arg0, %c0_i32 : i32, i32
  }
}

</mosaic_0001>

<llo_original>
// kernel: tpu_custom_call.1
$region0: #{tpu_custom_call.1}
  #allocation0 [shape = 'u32[]', space=smem, size = 0x4, offset = 0x4, fixed_abs, tag = 'smem constant byte address 0x4 - core index']
  #allocation1 [shape = 'u32[72,128]{1,0:T(1,128)}', space=vmem, size = 0x9000, scoped, tag = 'internal scratch']
  %s0 = inlined_call_operand.hbm [shape: bf16[16,128], index: 0, kind: input, shape index: {}]
  %s1 = inlined_call_operand.hbm [shape: bf16[16,128], index: 1, kind: input, shape index: {}]
  %s2 = inlined_call_operand.hbm [shape: bf16[128,384], index: 2, kind: input, shape index: {}]
  %s3 = inlined_call_operand.hbm [shape: f32[1,384], index: 3, kind: input, shape index: {}]
  %s4 = inlined_call_operand.hbm [shape: bf16[128,128], index: 4, kind: input, shape index: {}]
  %s5 = inlined_call_operand.vmem [shape: f32[1,128], index: 5, kind: input, shape index: {}]
  %s6 = inlined_call_operand.hbm [shape: bf16[128,128], index: 6, kind: input, shape index: {}]
  %s7 = inlined_call_operand.vmem [shape: f32[1,128], index: 7, kind: input, shape index: {}]
  %s8 = inlined_call_operand.hbm [shape: f32[16,128], index: 8, kind: output, shape index: {0}]
  %s9 = inlined_call_operand.hbm [shape: f32[16,128], index: 9, kind: output, shape index: {1}]
  %s10 = inlined_call_operand.hbm [shape: f32[16,128], index: 10, kind: output, shape index: {2}]
  %11 = xla_tuple %s8, %s9, %s10
  %s12 = sld [smem:[#allocation0]]
  $region82: #{tpu_custom_call.1} parent=0
    _
  %s14 = ssub.s32 1, %s12
  %s15 = scalar_select 0, %s14, %s12
  $region1: #{tpu_custom_call.1} parent=0
    #allocation2 [shape = 'u8[4096]{0}', space=vmem, size = 0x1000, scoped, tag = 'input window, operand 0, single buffered']
    #allocation3 [shape = 's32[1]{0}', space=sflag, size = 0x4, scoped, tag = 'scoped memory for tpu_custom_call.1']
    #allocation4 [shape = 's32[1]{0}', space=sflag, size = 0x4, scoped, tag = 'scoped memory for tpu_custom_call.1']
    #allocation5 [shape = 'u8[4096]{0}', space=vmem, size = 0x1000, scoped, tag = 'input window, operand 1, single buffered']
    #allocation6 [shape = 's32[1]{0}', space=sflag, size = 0x4, scoped, tag = 'scoped memory for tpu_custom_call.1']
    #allocation7 [shape = 'u8[98304]{0}', space=vmem, size = 0x18000, scoped, tag = 'input window, operand 2, single buffered']
    #allocation8 [shape = 'u8[1536]{0}', space=vmem, size = 0x800, scoped, tag = 'input window, operand 3, single buffered']
    #allocation9 [shape = 's32[1]{0}', space=sflag, size = 0x4, scoped, tag = 'scoped memory for tpu_custom_call.1']
    #allocation10 [shape = 'u8[32768]{0}', space=vmem, size = 0x8000, scoped, tag = 'input window, operand 4, single buffered']
    #allocation11 [shape = 'u8[32768]{0}', space=vmem, size = 0x8000, scoped, tag = 'input window, operand 6, single buffered']
    #allocation12 [shape = 's32[1]{0}', space=sflag, size = 0x4, scoped, tag = 'scoped memory for tpu_custom_call.1']
    #allocation13 [shape = 'u8[8192]{0}', space=vmem, size = 0x2000, scoped, tag = 'output window, operand 0, single buffered']
    #allocation14 [shape = 'u8[8192]{0}', space=vmem, size = 0x2000, scoped, tag = 'output window, operand 1, single buffered']
    #allocation15 [shape = 's32[1]{0}', space=sflag, size = 0x4, scoped, tag = 'scoped memory for tpu_custom_call.1']
    #allocation16 [shape = 'u8[8192]{0}', space=vmem, size = 0x2000, scoped, tag = 'output window, operand 2, single buffered']
    %16 = vsyncpa [#allocation3], 0
    %17 = vsyncpa [#allocation6], 0
    %18 = vsyncpa [#allocation9], 0
    %19 = vsyncpa [#allocation12], 0
    %20 = vsyncpa [#allocation4], 0
    %21 = vsyncpa [#allocation15], 0
    // Predicated region
    $region2: #{tpu_custom_call.1} parent=1 // pred_check
      _
    $region3: #{tpu_custom_call.1} parent=1 // pred_check_branch
      %23 = sbr.rel (0) target = $region5
    $region4: #{tpu_custom_call.1} parent=1 // pred_region
      %25 = vsyncadd [#allocation3], 0
      %s26 = sshll.u32 %s0, 4
      %s27 = int_to_ptr.hbm [resolvable:$true] %s26
      %s28 = sshll.u32 [#allocation2], 4
      %s29 = int_to_ptr.vmem [resolvable:$true] %s28
      %34 = dma.hbm_to_vmem [thread:$0]  %s27, 128, %s29, [#allocation3], 64, 64, 4
    $region5: #{tpu_custom_call.1} parent=1 // pred_fallthru
      _
    // Predicated region
    $region6: #{tpu_custom_call.1} parent=1 // pred_check
      _
    $region7: #{tpu_custom_call.1} parent=1 // pred_check_branch
      %36 = sbr.rel (0) target = $region9
    $region8: #{tpu_custom_call.1} parent=1 // pred_region
      %38 = vsyncadd [#allocation6], 0
      %s39 = sshll.u32 %s1, 4
      %s40 = int_to_ptr.hbm [resolvable:$true] %s39
      %s41 = sshll.u32 [#allocation5], 4
      %s42 = int_to_ptr.vmem [resolvable:$true] %s41
      %47 = dma.hbm_to_vmem [thread:$0]  %s40, 128, %s42, [#allocation6], 64, 64, 4
    $region9: #{tpu_custom_call.1} parent=1 // pred_fallthru
      _
    // Predicated region
    $region10: #{tpu_custom_call.1} parent=1 // pred_check
      _
    $region11: #{tpu_custom_call.1} parent=1 // pred_check_branch
      %49 = sbr.rel (0) target = $region13
    $region12: #{tpu_custom_call.1} parent=1 // pred_region
      %51 = vsyncadd [#allocation6], 0
      %s52 = sshll.u32 %s2, 4
      %s53 = int_to_ptr.hbm [resolvable:$true] %s52
      %s54 = sshll.u32 [#allocation7], 4
      %s55 = int_to_ptr.vmem [resolvable:$true] %s54
      %60 = dma.hbm_to_vmem [thread:$0]  %s53, 3072, %s55, [#allocation6], 192, 192, 12
    $region13: #{tpu_custom_call.1} parent=1 // pred_fallthru
      _
    // Predicated region
    $region14: #{tpu_custom_call.1} parent=1 // pred_check
      _
    $region15: #{tpu_custom_call.1} parent=1 // pred_check_branch
      %62 = sbr.rel (0) target = $region17
    $region16: #{tpu_custom_call.1} parent=1 // pred_region
      %64 = vsyncadd [#allocation9], 0
      %s66 = sshll.u32 %s3, 4
      %s67 = int_to_ptr.hbm [resolvable:$true] %s66
      %s68 = sshll.u32 [#allocation8], 4
      %s69 = int_to_ptr.vmem [resolvable:$true] %s68
      %71 = dma.hbm_to_vmem [thread:$0]  %s67, 48, %s69, [#allocation9]
    $region17: #{tpu_custom_call.1} parent=1 // pred_fallthru
      _
    // Predicated region
    $region18: #{tpu_custom_call.1} parent=1 // pred_check
      _
    $region19: #{tpu_custom_call.1} parent=1 // pred_check_branch
      %73 = sbr.rel (0) target = $region21
    $region20: #{tpu_custom_call.1} parent=1 // pred_region
      %75 = vsyncadd [#allocation9], 0
      %s76 = sshll.u32 %s4, 4
      %s77 = int_to_ptr.hbm [resolvable:$true] %s76
      %s78 = sshll.u32 [#allocation10], 4
      %s79 = int_to_ptr.vmem [resolvable:$true] %s78
      %84 = dma.hbm_to_vmem [thread:$0]  %s77, 1024, %s79, [#allocation9], 64, 64, 4
    $region21: #{tpu_custom_call.1} parent=1 // pred_fallthru
      _
    // Predicated region
    $region22: #{tpu_custom_call.1} parent=1 // pred_check
      _
    $region23: #{tpu_custom_call.1} parent=1 // pred_check_branch
      %86 = sbr.rel (0) target = $region25
    $region24: #{tpu_custom_call.1} parent=1 // pred_region
      _
    $region25: #{tpu_custom_call.1} parent=1 // pred_fallthru
      _
    // Predicated region
    $region26: #{tpu_custom_call.1} parent=1 // pred_check
      _
    $region27: #{tpu_custom_call.1} parent=1 // pred_check_branch
      %88 = sbr.rel (0) target = $region29
    $region28: #{tpu_custom_call.1} parent=1 // pred_region
      %90 = vsyncadd [#allocation12], 0
      %s91 = sshll.u32 %s6, 4
      %s92 = int_to_ptr.hbm [resolvable:$true] %s91
      %s93 = sshll.u32 [#allocation11], 4
      %s94 = int_to_ptr.vmem [resolvable:$true] %s93
      %99 = dma.hbm_to_vmem [thread:$0]  %s92, 1024, %s94, [#allocation12], 64, 64, 4
    $region29: #{tpu_custom_call.1} parent=1 // pred_fallthru
      _
    // Predicated region
    $region30: #{tpu_custom_call.1} parent=1 // pred_check
      _
    $region31: #{tpu_custom_call.1} parent=1 // pred_check_branch
      %101 = sbr.rel (0) target = $region33
    $region32: #{tpu_custom_call.1} parent=1 // pred_region
      _
    $region33: #{tpu_custom_call.1} parent=1 // pred_fallthru
      _
    // Predicated region
    $region34: #{tpu_custom_call.1} parent=1 // pred_check
      _
    $region35: #{tpu_custom_call.1} parent=1 // pred_check_branch
      %103 = sbr.rel (0) target = $region37
    $region36: #{tpu_custom_call.1} parent=1 // pred_region
      %105 = dma.done [#allocation3], 128
    $region37: #{tpu_custom_call.1} parent=1 // pred_fallthru
      _
    // Predicated region
    $region38: #{tpu_custom_call.1} parent=1 // pred_check
      _
    $region39: #{tpu_custom_call.1} parent=1 // pred_check_branch
      %107 = sbr.rel (0) target = $region41
    $region40: #{tpu_custom_call.1} parent=1 // pred_region
      %109 = dma.done [#allocation6], 128
    $region41: #{tpu_custom_call.1} parent=1 // pred_fallthru
      _
    // Predicated region
    $region42: #{tpu_custom_call.1} parent=1 // pred_check
      _
    $region43: #{tpu_custom_call.1} parent=1 // pred_check_branch
      %111 = sbr.rel (0) target = $region45
    $region44: #{tpu_custom_call.1} parent=1 // pred_region
      %113 = dma.done [#allocation6], 3072
    $region45: #{tpu_custom_call.1} parent=1 // pred_fallthru
      _
    // Predicated region
    $region46: #{tpu_custom_call.1} parent=1 // pred_check
      _
    $region47: #{tpu_custom_call.1} parent=1 // pred_check_branch
      %115 = sbr.rel (0) target = $region49
    $region48: #{tpu_custom_call.1} parent=1 // pred_region
      %117 = dma.done [#allocation9], 48
    $region49: #{tpu_custom_call.1} parent=1 // pred_fallthru
      _
    // Predicated region
    $region50: #{tpu_custom_call.1} parent=1 // pred_check
      _
    $region51: #{tpu_custom_call.1} parent=1 // pred_check_branch
      %119 = sbr.rel (0) target = $region53
    $region52: #{tpu_custom_call.1} parent=1 // pred_region
      %121 = dma.done [#allocation9], 1024
    $region53: #{tpu_custom_call.1} parent=1 // pred_fallthru
      _
    // Predicated region
    $region54: #{tpu_custom_call.1} parent=1 // pred_check
      _
    $region55: #{tpu_custom_call.1} parent=1 // pred_check_branch
      %123 = sbr.rel (0) target = $region57
    $region56: #{tpu_custom_call.1} parent=1 // pred_region
      %125 = dma.done [#allocation12], 1024
    $region57: #{tpu_custom_call.1} parent=1 // pred_fallthru
      _
    %v126 = vld [vmem:[#allocation2] sm:$0xf]
    %v127 = vld [vmem:[#allocation2 + $0x4] sm:$0xf]
    %v128 = vld [vmem:[#allocation5] sm:$0xf]
    %v129 = vld [vmem:[#allocation5 + $0x4] sm:$0xf]
    %v130 = vld [vmem:[#allocation7] sm:$0xff]
    %v131 = vld [vmem:[#allocation7 + $0x8] sm:$0xf]
    %v132 = vld [vmem:[#allocation7 + $0xc] sm:$0xff]
    %v133 = vld [vmem:[#allocation7 + $0x14] sm:$0xf]
    %v134 = vld [vmem:[#allocation7 + $0x18] sm:$0xff]
    %v135 = vld [vmem:[#allocation7 + $0x20] sm:$0xf]
    %v136 = vld [vmem:[#allocation7 + $0x24] sm:$0xff]
    %v137 = vld [vmem:[#allocation7 + $0x2c] sm:$0xf]
    %v138 = vld [vmem:[#allocation7 + $0x30] sm:$0xff]
    %v139 = vld [vmem:[#allocation7 + $0x38] sm:$0xf]
    %v140 = vld [vmem:[#allocation7 + $0x3c] sm:$0xff]
    %v141 = vld [vmem:[#allocation7 + $0x44] sm:$0xf]
    %v142 = vld [vmem:[#allocation7 + $0x48] sm:$0xff]
    %v143 = vld [vmem:[#allocation7 + $0x50] sm:$0xf]
    %v144 = vld [vmem:[#allocation7 + $0x54] sm:$0xff]
    %v145 = vld [vmem:[#allocation7 + $0x5c] sm:$0xf]
    %v146 = vld [vmem:[#allocation7 + $0x60] sm:$0xff]
    %v147 = vld [vmem:[#allocation7 + $0x68] sm:$0xf]
    %v148 = vld [vmem:[#allocation7 + $0x6c] sm:$0xff]
    %v149 = vld [vmem:[#allocation7 + $0x74] sm:$0xf]
    %v150 = vld [vmem:[#allocation7 + $0x78] sm:$0xff]
    %v151 = vld [vmem:[#allocation7 + $0x80] sm:$0xf]
    %v152 = vld [vmem:[#allocation7 + $0x84] sm:$0xff]
    %v153 = vld [vmem:[#allocation7 + $0x8c] sm:$0xf]
    %v154 = vld [vmem:[#allocation7 + $0x90] sm:$0xff]
    %v155 = vld [vmem:[#allocation7 + $0x98] sm:$0xf]
    %v156 = vld [vmem:[#allocation7 + $0x9c] sm:$0xff]
    %v157 = vld [vmem:[#allocation7 + $0xa4] sm:$0xf]
    %v158 = vld [vmem:[#allocation7 + $0xa8] sm:$0xff]
    %v159 = vld [vmem:[#allocation7 + $0xb0] sm:$0xf]
    %v160 = vld [vmem:[#allocation7 + $0xb4] sm:$0xff]
    %v161 = vld [vmem:[#allocation7 + $0xbc] sm:$0xf]
    %v162 = vld [vmem:[#allocation8] sm:$0x7]
    %v164 = vperm.slane %v162, 0
    %v165 = vperm.slane %v162, 1
    %v166 = vperm.slane %v162, 2
    %v172 = vunpack.c.l.b16 %v126
    %v173 = vunpack.c.l.b16 %v127
    %v174 = vpack.c.b16 %v173, %v172
    %v208 = vunpack.c.l.b16 %v130
    %v209 = vunpack.c.h.b16 %v130
    %v210 = vunpack.c.l.b16 %v131
    %v211 = vunpack.c.l.b16 %v132
    %v212 = vunpack.c.h.b16 %v132
    %v213 = vunpack.c.l.b16 %v133
    %v214 = vunpack.c.l.b16 %v134
    %v215 = vunpack.c.h.b16 %v134
    %v216 = vunpack.c.l.b16 %v135
    %v217 = vunpack.c.l.b16 %v136
    %v218 = vunpack.c.h.b16 %v136
    %v219 = vunpack.c.l.b16 %v137
    %v220 = vunpack.c.l.b16 %v138
    %v221 = vunpack.c.h.b16 %v138
    %v222 = vunpack.c.l.b16 %v139
    %v223 = vunpack.c.l.b16 %v140
    %v224 = vunpack.c.h.b16 %v140
    %v225 = vunpack.c.l.b16 %v141
    %v226 = vunpack.c.l.b16 %v142
    %v227 = vunpack.c.h.b16 %v142
    %v228 = vunpack.c.l.b16 %v143
    %v229 = vunpack.c.l.b16 %v144
    %v230 = vunpack.c.h.b16 %v144
    %v231 = vunpack.c.l.b16 %v145
    %v232 = vunpack.c.l.b16 %v146
    %v233 = vunpack.c.h.b16 %v146
    %v234 = vunpack.c.l.b16 %v147
    %v235 = vunpack.c.l.b16 %v148
    %v236 = vunpack.c.h.b16 %v148
    %v237 = vunpack.c.l.b16 %v149
    %v238 = vunpack.c.l.b16 %v150
    %v239 = vunpack.c.h.b16 %v150
    %v240 = vunpack.c.l.b16 %v151
    %v241 = vunpack.c.l.b16 %v152
    %v242 = vunpack.c.h.b16 %v152
    %v243 = vunpack.c.l.b16 %v153
    %v244 = vunpack.c.l.b16 %v154
    %v245 = vunpack.c.h.b16 %v154
    %v246 = vunpack.c.l.b16 %v155
    %v247 = vunpack.c.l.b16 %v156
    %v248 = vunpack.c.h.b16 %v156
    %v249 = vunpack.c.l.b16 %v157
    %v250 = vunpack.c.l.b16 %v158
    %v251 = vunpack.c.h.b16 %v158
    %v252 = vunpack.c.l.b16 %v159
    %v253 = vunpack.c.l.b16 %v160
    %v254 = vunpack.c.h.b16 %v160
    %v255 = vunpack.c.l.b16 %v161
    %v256 = vpack.c.b16 %v211, %v208
    %v257 = vpack.c.b16 %v212, %v209
    %v258 = vpack.c.b16 %v213, %v210
    %v259 = vpack.c.b16 %v217, %v214
    %v260 = vpack.c.b16 %v218, %v215
    %v261 = vpack.c.b16 %v219, %v216
    %v262 = vpack.c.b16 %v223, %v220
    %v263 = vpack.c.b16 %v224, %v221
    %v264 = vpack.c.b16 %v225, %v222
    %v265 = vpack.c.b16 %v229, %v226
    %v266 = vpack.c.b16 %v230, %v227
    %v267 = vpack.c.b16 %v231, %v228
    %v268 = vpack.c.b16 %v235, %v232
    %v269 = vpack.c.b16 %v236, %v233
    %v270 = vpack.c.b16 %v237, %v234
    %v271 = vpack.c.b16 %v241, %v238
    %v272 = vpack.c.b16 %v242, %v239
    %v273 = vpack.c.b16 %v243, %v240
    %v274 = vpack.c.b16 %v247, %v244
    %v275 = vpack.c.b16 %v248, %v245
    %v276 = vpack.c.b16 %v249, %v246
    %v277 = vpack.c.b16 %v253, %v250
    %v278 = vpack.c.b16 %v254, %v251
    %v279 = vpack.c.b16 %v255, %v252
    %304 = vmatpush.bf16.msra.mxu0 %v277
    %305 = vmatpush.bf16.msra.mxu0 %v274
    %306 = vmatpush.bf16.msra.mxu0 %v271
    %307 = vmatpush.bf16.msra.mxu0 %v268
    %308 = vmatpush.bf16.msra.mxu0 %v265
    %309 = vmatpush.bf16.msra.mxu0 %v262
    %310 = vmatpush.bf16.msra.mxu0 %v259
    %311 = vmatpush.bf16.msra.mxu0 %v256
    %312 = vmatmul.bf16.gmra.mxu0 %v174
    %v313 = vpop.f32.mrf.mxu0
    %v314 = vadd.f32 %v164, %v313
    %v315 = vpop.f32.mrf.mxu0
    %v316 = vadd.f32 %v164, %v315
    %317 = vdwg.mxu0
    %318 = vmatpush.bf16.msra.mxu0 %v278
    %319 = vmatpush.bf16.msra.mxu0 %v275
    %320 = vmatpush.bf16.msra.mxu0 %v272
    %321 = vmatpush.bf16.msra.mxu0 %v269
    %322 = vmatpush.bf16.msra.mxu0 %v266
    %323 = vmatpush.bf16.msra.mxu0 %v263
    %324 = vmatpush.bf16.msra.mxu0 %v260
    %325 = vmatpush.bf16.msra.mxu0 %v257
    %326 = vmatmul.bf16.gmra.mxu0 %v174
    %v327 = vpop.f32.mrf.mxu0
    %v328 = vadd.f32 %v165, %v327
    %v329 = vpop.f32.mrf.mxu0
    %v330 = vadd.f32 %v165, %v329
    %331 = vdwg.mxu0
    %332 = vmatpush.bf16.msra.mxu0 %v279
    %333 = vmatpush.bf16.msra.mxu0 %v276
    %334 = vmatpush.bf16.msra.mxu0 %v273
    %335 = vmatpush.bf16.msra.mxu0 %v270
    %336 = vmatpush.bf16.msra.mxu0 %v267
    %337 = vmatpush.bf16.msra.mxu0 %v264
    %338 = vmatpush.bf16.msra.mxu0 %v261
    %339 = vmatpush.bf16.msra.mxu0 %v258
    %340 = vmatmul.bf16.gmra.mxu0 %v174
    %v341 = vpop.f32.mrf.mxu0
    %v342 = vadd.f32 %v166, %v341
    %v343 = vpop.f32.mrf.mxu0
    %v344 = vadd.f32 %v166, %v343
    %345 = vdwg.mxu0
    %346 = vst [vmem:[#allocation13] sm:$0xff] %v342
    %347 = vst [vmem:[#allocation13 + $0x8] sm:$0xff] %v344
    %v348 = vunpack.c.l.bf16 %v128
    %v349 = vunpack.c.l.bf16 %v129
    %v350 = vmul.f32 %v314, %v348
    %v351 = vmul.f32 %v316, %v349
    %v352 = vadd.f32 %v350, %v328
    %v353 = vadd.f32 %v351, %v330
    %v354 = vld [vmem:[#allocation11] sm:$0xf]
    %v355 = vld [vmem:[#allocation11 + $0x4] sm:$0xf]
    %v356 = vld [vmem:[#allocation11 + $0x8] sm:$0xf]
    %v357 = vld [vmem:[#allocation11 + $0xc] sm:$0xf]
    %v358 = vld [vmem:[#allocation11 + $0x10] sm:$0xf]
    %v359 = vld [vmem:[#allocation11 + $0x14] sm:$0xf]
    %v360 = vld [vmem:[#allocation11 + $0x18] sm:$0xf]
    %v361 = vld [vmem:[#allocation11 + $0x1c] sm:$0xf]
    %v362 = vld [vmem:[#allocation11 + $0x20] sm:$0xf]
    %v363 = vld [vmem:[#allocation11 + $0x24] sm:$0xf]
    %v364 = vld [vmem:[#allocation11 + $0x28] sm:$0xf]
    %v365 = vld [vmem:[#allocation11 + $0x2c] sm:$0xf]
    %v366 = vld [vmem:[#allocation11 + $0x30] sm:$0xf]
    %v367 = vld [vmem:[#allocation11 + $0x34] sm:$0xf]
    %v368 = vld [vmem:[#allocation11 + $0x38] sm:$0xf]
    %v369 = vld [vmem:[#allocation11 + $0x3c] sm:$0xf]
    %v370 = vld [vmem:[%s7] sm:$0x1]
    %v372 = vperm.slane %v370, 0
    %v376 = vunpack.c.l.b16 %v128
    %v377 = vunpack.c.l.b16 %v129
    %v378 = vpack.c.b16 %v377, %v376
    %v396 = vunpack.c.l.b16 %v354
    %v397 = vunpack.c.l.b16 %v355
    %v398 = vunpack.c.l.b16 %v356
    %v399 = vunpack.c.l.b16 %v357
    %v400 = vunpack.c.l.b16 %v358
    %v401 = vunpack.c.l.b16 %v359
    %v402 = vunpack.c.l.b16 %v360
    %v403 = vunpack.c.l.b16 %v361
    %v404 = vunpack.c.l.b16 %v362
    %v405 = vunpack.c.l.b16 %v363
    %v406 = vunpack.c.l.b16 %v364
    %v407 = vunpack.c.l.b16 %v365
    %v408 = vunpack.c.l.b16 %v366
    %v409 = vunpack.c.l.b16 %v367
    %v410 = vunpack.c.l.b16 %v368
    %v411 = vunpack.c.l.b16 %v369
    %v412 = vpack.c.b16 %v397, %v396
    %v413 = vpack.c.b16 %v399, %v398
    %v414 = vpack.c.b16 %v401, %v400
    %v415 = vpack.c.b16 %v403, %v402
    %v416 = vpack.c.b16 %v405, %v404
    %v417 = vpack.c.b16 %v407, %v406
    %v418 = vpack.c.b16 %v409, %v408
    %v419 = vpack.c.b16 %v411, %v410
    %428 = vmatpush.bf16.msra.mxu0 %v419
    %429 = vmatpush.bf16.msra.mxu0 %v418
    %430 = vmatpush.bf16.msra.mxu0 %v417
    %431 = vmatpush.bf16.msra.mxu0 %v416
    %432 = vmatpush.bf16.msra.mxu0 %v415
    %433 = vmatpush.bf16.msra.mxu0 %v414
    %434 = vmatpush.bf16.msra.mxu0 %v413
    %435 = vmatpush.bf16.msra.mxu0 %v412
    %436 = vmatmul.bf16.gmra.mxu0 %v378
    %v437 = vpop.f32.mrf.mxu0
    %v438 = vadd.f32 %v372, %v437
    %v439 = vpop.f32.mrf.mxu0
    %v440 = vadd.f32 %v372, %v439
    %441 = vdwg.mxu0
    %442 = vst [vmem:[#allocation14] sm:$0xff] %v438
    %443 = vst [vmem:[#allocation14 + $0x8] sm:$0xff] %v440
    %v444 = vpack.c.bf16 %v353, %v352
    %v445 = vld [vmem:[#allocation10] sm:$0xf]
    %v446 = vld [vmem:[#allocation10 + $0x4] sm:$0xf]
    %v447 = vld [vmem:[#allocation10 + $0x8] sm:$0xf]
    %v448 = vld [vmem:[#allocation10 + $0xc] sm:$0xf]
    %v449 = vld [vmem:[#allocation10 + $0x10] sm:$0xf]
    %v450 = vld [vmem:[#allocation10 + $0x14] sm:$0xf]
    %v451 = vld [vmem:[#allocation10 + $0x18] sm:$0xf]
    %v452 = vld [vmem:[#allocation10 + $0x1c] sm:$0xf]
    %v453 = vld [vmem:[#allocation10 + $0x20] sm:$0xf]
    %v454 = vld [vmem:[#allocation10 + $0x24] sm:$0xf]
    %v455 = vld [vmem:[#allocation10 + $0x28] sm:$0xf]
    %v456 = vld [vmem:[#allocation10 + $0x2c] sm:$0xf]
    %v457 = vld [vmem:[#allocation10 + $0x30] sm:$0xf]
    %v458 = vld [vmem:[#allocation10 + $0x34] sm:$0xf]
    %v459 = vld [vmem:[#allocation10 + $0x38] sm:$0xf]
    %v460 = vld [vmem:[#allocation10 + $0x3c] sm:$0xf]
    %v461 = vld [vmem:[%s5] sm:$0x1]
    %v463 = vperm.slane %v461, 0
    %v481 = vunpack.c.l.b16 %v445
    %v482 = vunpack.c.l.b16 %v446
    %v483 = vunpack.c.l.b16 %v447
    %v484 = vunpack.c.l.b16 %v448
    %v485 = vunpack.c.l.b16 %v449
    %v486 = vunpack.c.l.b16 %v450
    %v487 = vunpack.c.l.b16 %v451
    %v488 = vunpack.c.l.b16 %v452
    %v489 = vunpack.c.l.b16 %v453
    %v490 = vunpack.c.l.b16 %v454
    %v491 = vunpack.c.l.b16 %v455
    %v492 = vunpack.c.l.b16 %v456
    %v493 = vunpack.c.l.b16 %v457
    %v494 = vunpack.c.l.b16 %v458
    %v495 = vunpack.c.l.b16 %v459
    %v496 = vunpack.c.l.b16 %v460
    %v497 = vpack.c.b16 %v482, %v481
    %v498 = vpack.c.b16 %v484, %v483
    %v499 = vpack.c.b16 %v486, %v485
    %v500 = vpack.c.b16 %v488, %v487
    %v501 = vpack.c.b16 %v490, %v489
    %v502 = vpack.c.b16 %v492, %v491
    %v503 = vpack.c.b16 %v494, %v493
    %v504 = vpack.c.b16 %v496, %v495
    %513 = vmatpush.bf16.msra.mxu0 %v504
    %514 = vmatpush.bf16.msra.mxu0 %v503
    %515 = vmatpush.bf16.msra.mxu0 %v502
    %516 = vmatpush.bf16.msra.mxu0 %v501
    %517 = vmatpush.bf16.msra.mxu0 %v500
    %518 = vmatpush.bf16.msra.mxu0 %v499
    %519 = vmatpush.bf16.msra.mxu0 %v498
    %520 = vmatpush.bf16.msra.mxu0 %v497
    %521 = vmatmul.bf16.gmra.mxu0 %v444
    %v522 = vpop.f32.mrf.mxu0
    %v523 = vadd.f32 %v463, %v522
    %v524 = vpop.f32.mrf.mxu0
    %v525 = vadd.f32 %v463, %v524
    %526 = vdwg.mxu0
    %527 = vst [vmem:[#allocation16] sm:$0xff] %v523
    %528 = vst [vmem:[#allocation16 + $0x8] sm:$0xff] %v525
    // Predicated region
    $region58: #{tpu_custom_call.1} parent=1 // pred_check
      _
    $region59: #{tpu_custom_call.1} parent=1 // pred_check_branch
      %530 = sbr.rel (0) target = $region61
    $region60: #{tpu_custom_call.1} parent=1 // pred_region
      %532 = vsyncadd [#allocation4], 0
      %s533 = sshll.u32 [#allocation13], 4
      %s534 = int_to_ptr.vmem [resolvable:$true] %s533
      %s535 = sshll.u32 %s8, 4
      %s536 = int_to_ptr.hbm [resolvable:$true] %s535
      %541 = dma.vmem_to_hbm [thread:$0]  %s534, 256, %s536, [#allocation4], 128, 128, 8
    $region61: #{tpu_custom_call.1} parent=1 // pred_fallthru
      _
    // Predicated region
    $region62: #{tpu_custom_call.1} parent=1 // pred_check
      _
    $region63: #{tpu_custom_call.1} parent=1 // pred_check_branch
      %543 = sbr.rel (0) target = $region65
    $region64: #{tpu_custom_call.1} parent=1 // pred_region
      %545 = vsyncadd [#allocation15], 0
      %s546 = sshll.u32 [#allocation14], 4
      %s547 = int_to_ptr.vmem [resolvable:$true] %s546
      %s548 = sshll.u32 %s9, 4
      %s549 = int_to_ptr.hbm [resolvable:$true] %s548
      %554 = dma.vmem_to_hbm [thread:$0]  %s547, 256, %s549, [#allocation15], 128, 128, 8
    $region65: #{tpu_custom_call.1} parent=1 // pred_fallthru
      _
    // Predicated region
    $region66: #{tpu_custom_call.1} parent=1 // pred_check
      _
    $region67: #{tpu_custom_call.1} parent=1 // pred_check_branch
      %556 = sbr.rel (0) target = $region69
    $region68: #{tpu_custom_call.1} parent=1 // pred_region
      %558 = vsyncadd [#allocation15], 0
      %s559 = sshll.u32 [#allocation16], 4
      %s560 = int_to_ptr.vmem [resolvable:$true] %s559
      %s561 = sshll.u32 %s10, 4
      %s562 = int_to_ptr.hbm [resolvable:$true] %s561
      %567 = dma.vmem_to_hbm [thread:$0]  %s560, 256, %s562, [#allocation15], 128, 128, 8
    $region69: #{tpu_custom_call.1} parent=1 // pred_fallthru
      _
    // Predicated region
    $region70: #{tpu_custom_call.1} parent=1 // pred_check
      _
    $region71: #{tpu_custom_call.1} parent=1 // pred_check_branch
      %569 = sbr.rel (0) target = $region73
    $region72: #{tpu_custom_call.1} parent=1 // pred_region
      %571 = dma.done [#allocation4], 256
    $region73: #{tpu_custom_call.1} parent=1 // pred_fallthru
      _
    // Predicated region
    $region74: #{tpu_custom_call.1} parent=1 // pred_check
      _
    $region75: #{tpu_custom_call.1} parent=1 // pred_check_branch
      %573 = sbr.rel (0) target = $region77
    $region76: #{tpu_custom_call.1} parent=1 // pred_region
      %575 = dma.done [#allocation15], 256
    $region77: #{tpu_custom_call.1} parent=1 // pred_fallthru
      _
    // Predicated region
    $region78: #{tpu_custom_call.1} parent=1 // pred_check
      _
    $region79: #{tpu_custom_call.1} parent=1 // pred_check_branch
      %577 = sbr.rel (0) target = $region81
    $region80: #{tpu_custom_call.1} parent=1 // pred_region
      %579 = dma.done [#allocation15], 256
    $region81: #{tpu_custom_call.1} parent=1 // pred_fallthru
      _
    %580 = vsyncpa [#allocation3], 1
    %581 = vsyncpa [#allocation6], 1
    %582 = vsyncpa [#allocation9], 1
    %583 = vsyncpa [#allocation12], 1
    %584 = vsyncpa [#allocation4], 1
    %585 = vsyncpa [#allocation15], 1

</llo_original>
